<compile_context>
chip_gen: v7x
topology: tpu7x:2x2x1
jax: 0.10.0
libtpu: 0.0.40
codegen_flags: <defaults>
</compile_context>

<pallas_src>
import jax
import jax.numpy as jnp
from jax.experimental import pallas as pl
from jax.experimental.pallas import tpu as pltpu


def _signed_geomean_pair_kernel(a_ref, b_ref, o_ref):
    # Elementwise: out = sign(a*b) * sqrt(|a*b|); compute in f32 (bf16-safe).
    a = a_ref[...].astype(jnp.float32)
    b = b_ref[...].astype(jnp.float32)
    p = a * b
    mag = jnp.sqrt(jnp.abs(p))                      # EUP sqrt (separate slot)
    # sign(p)*mag without jnp.sign's extra compares; p==0 -> mag==0 -> matches.
    o_ref[...] = jnp.where(p < 0.0, -mag, mag).astype(o_ref.dtype)


def _signed_geomean_packed_kernel(x_ref, o_ref):
    # Fallback: x_ref is a (tr, 2, L) block holding both elements of each pair.
    x = x_ref[...].astype(jnp.float32)
    p = x[:, 0, :] * x[:, 1, :]
    mag = jnp.sqrt(jnp.abs(p))
    o_ref[...] = jnp.where(p < 0.0, -mag, mag).astype(o_ref.dtype)


def _largest_divisor(n, multiple, cap):
    """Largest d <= cap with d % multiple == 0 and n % d == 0 (None if none)."""
    best = None
    d = multiple
    while d <= min(n, cap):
        if n % d == 0:
            best = d
        d += multiple
    return best


def _pick_row_tile(rows, max_rows, sub):
    """Row-block size: full dim if it fits, else a nice divisor, else sub-multiple."""
    if rows <= max_rows:
        return rows                                 # full dim: always legal
    d = _largest_divisor(rows, sub, max_rows)
    if d is not None:
        return d
    return max(sub, (max_rows // sub) * sub)        # edge block padded by Pallas


def signed_geomean_module(x: jax.Array, k: int = 2, dim: int = 1) -> jax.Array:
    """Forward pass of SignedGeomean(k=2, dim=1) for NCHW input."""
    if dim != 1 or k != 2:
        raise NotImplementedError("This kernel implements the default k=2, dim=1.")
    N, C, H, W = x.shape
    if C % k != 0:
        raise ValueError(f"Channel dim {C} not divisible by k={k}")
    P = C // k
    R = N * P                # number of channel pairs (rows of the flattened slab)
    L = H * W                # plane size (lane dim of the flattened slab)

    itemsize = jnp.dtype(x.dtype).itemsize
    sub = {4: 8, 2: 16, 1: 32}.get(itemsize, 8)     # native sublane multiple
    target_elems = 256 * 1024                       # ~1 MiB f32 per VMEM buffer

    if L % 128 == 0:
        # Lane-dense main path: (R, 2L) slab; a-half / b-half selected purely
        # via index_maps (no strided XLA slices, input read once from HBM).
        x2 = x.reshape(R, 2 * L)                    # contiguous -> free
        tl = _largest_divisor(L, 128, 2048)         # lane tile (multiple of 128)
        max_rows = max(sub, min(1024, (target_elems // tl) // sub * sub))
        tr = _pick_row_tile(R, max_rows, sub)
        n_lane_blocks = L // tl
        grid = (pl.cdiv(R, tr), n_lane_blocks)
        out2d = pl.pallas_call(
            _signed_geomean_pair_kernel,
            out_shape=jax.ShapeDtypeStruct((R, L), x.dtype),
            grid=grid,
            in_specs=[
                pl.BlockSpec((tr, tl), lambda i, j: (i, j)),                  # a half
                pl.BlockSpec((tr, tl), lambda i, j: (i, j + n_lane_blocks)),  # b half
            ],
            out_specs=pl.BlockSpec((tr, tl), lambda i, j: (i, j)),
            compiler_params=pltpu.CompilerParams(
                dimension_semantics=("parallel", "parallel")),
        )(x2, x2)
    else:
        # General fallback (H*W not a multiple of 128): keep the k axis inside
        # the block (last two block dims equal the full array dims (2, L)) and
        # split the pair in-kernel. Still no wrapper-side copies.
        x3 = x.reshape(R, 2, L)                     # contiguous -> free
        lane_pad = -(-L // 128) * 128
        budget = 2 * 1024 * 1024                    # ~2 MiB per input buffer
        max_rows = max(sub, min(1024, (budget // (8 * lane_pad * itemsize)) // sub * sub))
        tr = _pick_row_tile(R, max_rows, sub)
        grid = (pl.cdiv(R, tr),)
        out2d = pl.pallas_call(
            _signed_geomean_packed_kernel,
            out_shape=jax.ShapeDtypeStruct((R, L), x.dtype),
            grid=grid,
            in_specs=[pl.BlockSpec((tr, 2, L), lambda i: (i, 0, 0))],
            out_specs=pl.BlockSpec((tr, L), lambda i: (i, 0)),
            compiler_params=pltpu.CompilerParams(
                dimension_semantics=("parallel",)),
        )(x3)

    return out2d.reshape(N, P, H, W)


def _reference(x, k=2):
    N, C, H, W = x.shape
    xr = x.reshape(N, C // k, k, H, W)
    prods = jnp.prod(xr, axis=2)
    return jnp.sign(prods) * jnp.sqrt(jnp.abs(prods))


if __name__ == "__main__":
    key = jax.random.PRNGKey(0)
    k1, k2 = jax.random.split(key)

    # Primary shape implied by the module (NCHW, k=2 over channels).
    x = jax.random.normal(k1, (2, 4, 16, 16), dtype=jnp.float32)
    out = jax.block_until_ready(signed_geomean_module(x, k=2, dim=1))
    assert out.shape == (2, 2, 16, 16)
    assert jnp.allclose(out, _reference(x), atol=1e-6, rtol=1e-6)

    # Second small shape exercising a multi-block grid and the b-half lane offset.
    x2 = jax.random.normal(k2, (2, 8, 64, 64), dtype=jnp.float32)
    out2 = jax.block_until_ready(signed_geomean_module(x2, k=2, dim=1))
    assert jnp.allclose(out2, _reference(x2), atol=1e-6, rtol=1e-6)

    # TODO(synk): backward pass (SignedGeomeanFunc.backward / clamp_grad) is not
    # implemented; only the forward semantics are provided here.
    print("KERNEL_OK")
</pallas_src>

<mosaic_0001>
module attributes {stable_mosaic.version = 11 : i64} {
  func.func @_signed_geomean_pair_kernel(%arg0: i32, %arg1: i32, %arg2: memref<4x256xf32, #tpu.memory_space<vmem>>, %arg3: memref<4x256xf32, #tpu.memory_space<vmem>>, %arg4: memref<4x256xf32, #tpu.memory_space<vmem>>) attributes {dimension_semantics = [#tpu.dimension_semantics<parallel>, #tpu.dimension_semantics<parallel>], iteration_bounds = array<i64: 1, 1>, scalar_prefetch = 0 : i64, scratch_operands = 0 : i64, tpu.core_type = #tpu.core_type<tc>, window_params = [{transform_indices = @transform_0, window_bounds = array<i64: 4, 256>}, {transform_indices = @transform_1, window_bounds = array<i64: 4, 256>}, {transform_indices = @transform_2, window_bounds = array<i64: 4, 256>}]} {
    %c0 = arith.constant 0 : index
    %c0_0 = arith.constant 0 : index
    %0 = vector.load %arg2[%c0, %c0_0] : memref<4x256xf32, #tpu.memory_space<vmem>>, vector<4x256xf32>
    %c0_1 = arith.constant 0 : index
    %c0_2 = arith.constant 0 : index
    %1 = vector.load %arg3[%c0_1, %c0_2] : memref<4x256xf32, #tpu.memory_space<vmem>>, vector<4x256xf32>
    %2 = arith.mulf %0, %1 : vector<4x256xf32>
    %3 = math.absf %2 : vector<4x256xf32>
    %4 = math.sqrt %3 : vector<4x256xf32>
    %cst = arith.constant 0.000000e+00 : f32
    %5 = vector.broadcast %cst : f32 to vector<4x256xf32>
    %6 = arith.cmpf olt, %2, %5 : vector<4x256xf32>
    %cst_3 = arith.constant 0.000000e+00 : f32
    %7 = vector.broadcast %cst_3 : f32 to vector<4x256xf32>
    %8 = arith.subf %7, %4 : vector<4x256xf32>
    %9 = arith.select %6, %8, %4 : vector<4x256xi1>, vector<4x256xf32>
    %c0_4 = arith.constant 0 : index
    %c0_5 = arith.constant 0 : index
    %10 = vector.load %arg4[%c0_4, %c0_5] : memref<4x256xf32, #tpu.memory_space<vmem>>, vector<4x256xf32>
    tpu.vector_store %arg4[%c0_4, %c0_5], %9 {strides = array<i32>} : memref<4x256xf32, #tpu.memory_space<vmem>>, vector<4x256xf32>,
    return
  }
  func.func @transform_0(%arg0: i32, %arg1: i32) -> (i32, i32) {
    %c0_i32 = arith.constant 0 : i32
    return %arg0, %arg1 : i32, i32
  }
  func.func @transform_1(%arg0: i32, %arg1: i32) -> (i32, i32) {
    %c1_i32 = arith.constant 1 : i32
    %0 = arith.addi %arg1, %c1_i32 : i32
    %c0_i32 = arith.constant 0 : i32
    return %arg0, %0 : i32, i32
  }
  func.func @transform_2(%arg0: i32, %arg1: i32) -> (i32, i32) {
    %c0_i32 = arith.constant 0 : i32
    return %arg0, %arg1 : i32, i32
  }
}

</mosaic_0001>

<llo_original>
// kernel: tpu_custom_call.1
$region0: #{tpu_custom_call.1}
  #allocation0 [shape = 'u32[]', space=smem, size = 0x4, offset = 0x4, fixed_abs, tag = 'smem constant byte address 0x4 - core index']
  #allocation1 [shape = 'u32[144,128]{1,0:T(1,128)}', space=vmem, size = 0x12000, scoped, tag = 'internal scratch']
  %s0 = inlined_call_operand.hbm [shape: f32[4,512], index: 0, kind: input, shape index: {}]
  %s1 = inlined_call_operand.hbm [shape: f32[4,512], index: 1, kind: input, shape index: {}]
  %s2 = inlined_call_operand.hbm [shape: f32[4,256], index: 2, kind: output, shape index: {}]
  %s3 = sld [smem:[#allocation0]]
  $region26: #{tpu_custom_call.1} parent=0
    _
  %s5 = ssub.s32 1, %s3
  %s6 = scalar_select 0, %s5, %s3
  $region1: #{tpu_custom_call.1} parent=0
    #allocation2 [shape = 'u8[4096]{0}', space=vmem, size = 0x1000, scoped, tag = 'input window, operand 0, single buffered']
    #allocation3 [shape = 's32[1]{0}', space=sflag, size = 0x4, scoped, tag = 'scoped memory for tpu_custom_call.1']
    #allocation4 [shape = 's32[1]{0}', space=sflag, size = 0x4, scoped, tag = 'scoped memory for tpu_custom_call.1']
    #allocation5 [shape = 'u8[4096]{0}', space=vmem, size = 0x1000, scoped, tag = 'input window, operand 1, single buffered']
    #allocation6 [shape = 's32[1]{0}', space=sflag, size = 0x4, scoped, tag = 'scoped memory for tpu_custom_call.1']
    #allocation7 [shape = 'u8[4096]{0}', space=vmem, size = 0x1000, scoped, tag = 'output window, operand 0, single buffered']
    %7 = vsyncpa [#allocation3], 0
    %8 = vsyncpa [#allocation6], 0
    %9 = vsyncpa [#allocation4], 0
    // Predicated region
    $region2: #{tpu_custom_call.1} parent=1 // pred_check
      _
    $region3: #{tpu_custom_call.1} parent=1 // pred_check_branch
      %11 = sbr.rel (0) target = $region5
    $region4: #{tpu_custom_call.1} parent=1 // pred_region
      %s13 = ssub.s32 128, 128
      %14 = vsyncadd [#allocation3], %s13
      %s16 = sshll.u32 [#allocation2], 4
      %s17 = int_to_ptr.vmem [resolvable:$true] %s16
      %19 = dma.hbm_to_vmem [thread:$0]  %s0, 128, %s17, [#allocation3]
    $region5: #{tpu_custom_call.1} parent=1 // pred_fallthru
      _
    // Predicated region
    $region6: #{tpu_custom_call.1} parent=1 // pred_check
      _
    $region7: #{tpu_custom_call.1} parent=1 // pred_check_branch
      %21 = sbr.rel (0) target = $region9
    $region8: #{tpu_custom_call.1} parent=1 // pred_region
      %s22 = sadd.s32 0, 1
      %s23 = smul.u32 2, %s22
      %s25 = ssub.s32 128, 128
      %26 = vsyncadd [#allocation6], %s25
      %s27 = smul.addr %s23, 64
      %s28 = scalar_lea.hbm %s1, %s27
      %s30 = sshll.u32 [#allocation5], 4
      %s31 = int_to_ptr.vmem [resolvable:$true] %s30
      %33 = dma.hbm_to_vmem [thread:$0]  %s28, 128, %s31, [#allocation6]
    $region9: #{tpu_custom_call.1} parent=1 // pred_fallthru
      _
    // Predicated region
    $region10: #{tpu_custom_call.1} parent=1 // pred_check
      _
    $region11: #{tpu_custom_call.1} parent=1 // pred_check_branch
      %35 = sbr.rel (0) target = $region13
    $region12: #{tpu_custom_call.1} parent=1 // pred_region
      %36 = dma.done [#allocation3], 128
    $region13: #{tpu_custom_call.1} parent=1 // pred_fallthru
      _
    // Predicated region
    $region14: #{tpu_custom_call.1} parent=1 // pred_check
      _
    $region15: #{tpu_custom_call.1} parent=1 // pred_check_branch
      %38 = sbr.rel (0) target = $region17
    $region16: #{tpu_custom_call.1} parent=1 // pred_region
      %39 = dma.done [#allocation6], 128
    $region17: #{tpu_custom_call.1} parent=1 // pred_fallthru
      _
    %s40 = sadd.s32 0, 1
    %s41 = smul.u32 2, %s40
    %v42 = vld [vmem:[#allocation2] sm:$0xff]
    %v43 = vld [vmem:[#allocation5] sm:$0xff]
    %v44 = vmul.f32 %v42, %v43
    %v45 = vand.u32 2147483647, %v44
    %v46 = vrsqrt.pop %v45
    %v47 = vmul.f32 %v45, %v46
    %vm48 = vcmp.eq.f32.partialorder %v45, inf
    %v49 = vsel %vm48, %v45, %v47
    %vm50 = vcmp.eq.f32.partialorder %v45, 0.0
    %v51 = vand.u32 %v45, 2147483648
    %v52 = vsel %vm50, %v51, %v49
    %vm53 = vcmp.lt.f32.partialorder %v44, 0.0
    %v54 = vsub.f32 0.0, %v52
    %v55 = vsel %vm53, %v54, %v52
    %56 = vst [vmem:[#allocation7] sm:$0xff] %v55
    // Predicated region
    $region18: #{tpu_custom_call.1} parent=1 // pred_check
      _
    $region19: #{tpu_custom_call.1} parent=1 // pred_check_branch
      %58 = sbr.rel (0) target = $region21
    $region20: #{tpu_custom_call.1} parent=1 // pred_region
      %s60 = ssub.s32 128, 128
      %61 = vsyncadd [#allocation4], %s60
      %s63 = sshll.u32 [#allocation7], 4
      %s64 = int_to_ptr.vmem [resolvable:$true] %s63
      %66 = dma.vmem_to_hbm [thread:$0]  %s64, 128, %s2, [#allocation4]
    $region21: #{tpu_custom_call.1} parent=1 // pred_fallthru
      _
    // Predicated region
    $region22: #{tpu_custom_call.1} parent=1 // pred_check
      _
    $region23: #{tpu_custom_call.1} parent=1 // pred_check_branch
      %68 = sbr.rel (0) target = $region25
    $region24: #{tpu_custom_call.1} parent=1 // pred_region
      %69 = dma.done [#allocation4], 128
    $region25: #{tpu_custom_call.1} parent=1 // pred_fallthru
      _
    %70 = vsyncpa [#allocation3], 1
    %71 = vsyncpa [#allocation6], 1
    %72 = vsyncpa [#allocation4], 1

</llo_original>
